<compile_context>
chip_gen: v5e
topology: v5e:2x2
jax: 0.10.0
libtpu: 0.0.40
codegen_flags: <defaults>
</compile_context>

<pallas_src>
import jax
import jax.numpy as jnp
from jax.experimental import pallas as pl
from jax.experimental.pallas import tpu as pltpu


def residual_add_kernel(x_ref, w_ref, b_ref, o_ref):
    # x_ref/o_ref: (tm, D); w_ref: (D, D); b_ref: (1, D)
    x = x_ref[...]
    h = jnp.dot(x, w_ref[...], preferred_element_type=jnp.float32)
    h = h + b_ref[...]                          # bias broadcast over rows
    h = jax.nn.gelu(h, approximate=True)        # tanh GELU -> EUP path
    o_ref[...] = (h + x).astype(o_ref.dtype)    # residual add (fused)


def residual_add(x, w, b, *, tile_m=512):
    """out = gelu(x @ w + b) + x,  x: (B, S, D), w: (D, D), b: (D,)."""
    B, S, D = x.shape
    M = B * S
    x2 = x.reshape(M, D)
    b2 = b.reshape(1, D)

    tm = min(tile_m, M)
    grid_m = pl.cdiv(M, tm)

    out = pl.pallas_call(
        residual_add_kernel,
        out_shape=jax.ShapeDtypeStruct((M, D), x.dtype),
        grid_spec=pltpu.PrefetchScalarGridSpec(
            num_scalar_prefetch=0,
            grid=(grid_m,),
            in_specs=[
                pl.BlockSpec((tm, D), lambda i: (i, 0)),  # x : tiled over rows
                pl.BlockSpec((D, D), lambda i: (0, 0)),   # W : VMEM-resident
                pl.BlockSpec((1, D), lambda i: (0, 0)),   # b : VMEM-resident
            ],
            out_specs=pl.BlockSpec((tm, D), lambda i: (i, 0)),
        ),
        input_output_aliases={0: 0},                      # reuse x2's buffer
        cost_estimate=pl.CostEstimate(
            flops=2 * M * D * D + 3 * M * D,
            transcendentals=M * D,
            bytes_accessed=(2 * M * D + D * D + D) * x.dtype.itemsize,
        ),
        compiler_params=pltpu.CompilerParams(
            dimension_semantics=("parallel",)),
    )(x2, w, b2)
    return out.reshape(B, S, D)


def residual_add_ref(x, w, b):
    return jax.nn.gelu(jnp.einsum("bsd,de->bse", x, w) + b,
                       approximate=True) + x


if __name__ == "__main__":
    # Small but lane-dense shapes: D = 128 (full vreg lane width),
    # M = B*S = 512 rows split into 4 tiles of 128 rows to exercise the
    # double-buffered pipeline across grid steps.
    B, S, D = 2, 256, 128
    key = jax.random.PRNGKey(0)
    kx, kw, kb = jax.random.split(key, 3)

    x = jax.random.normal(kx, (B, S, D), dtype=jnp.float32)
    # deterministic parameter init for the wrapped fn (Linear D->D)
    w = jax.random.normal(kw, (D, D), dtype=jnp.float32) * (1.0 / jnp.sqrt(D))
    b = jax.random.normal(kb, (D,), dtype=jnp.float32) * 0.01

    out = residual_add(x, w, b, tile_m=128)
    out = jax.block_until_ready(out)

    ref = residual_add_ref(x, w, b)
    assert out.shape == (B, S, D)
    assert jnp.allclose(out, ref, atol=1e-3, rtol=1e-3), "mismatch vs reference"

    print("KERNEL_OK")
</pallas_src>

<mosaic_0001>
module attributes {stable_mosaic.version = 11 : i64} {
  func.func @residual_add_kernel(%arg0: i32, %arg1: memref<128x128xf32, #tpu.memory_space<vmem>>, %arg2: memref<128x128xf32, #tpu.memory_space<vmem>>, %arg3: memref<1x128xf32, #tpu.memory_space<vmem>>, %arg4: memref<128x128xf32, #tpu.memory_space<vmem>>) attributes {dimension_semantics = [#tpu.dimension_semantics<parallel>], iteration_bounds = array<i64: 4>, scalar_prefetch = 0 : i64, scratch_operands = 0 : i64, tpu.core_type = #tpu.core_type<tc>, window_params = [{transform_indices = @transform_0, window_bounds = array<i64: 128, 128>}, {pipeline_mode = #tpu.pipeline_mode<synchronous>, transform_indices = @transform_1, window_bounds = array<i64: 128, 128>}, {pipeline_mode = #tpu.pipeline_mode<synchronous>, transform_indices = @transform_2, window_bounds = array<i64: 1, 128>}, {transform_indices = @transform_3, window_bounds = array<i64: 128, 128>}]} {
    %c0 = arith.constant 0 : index
    %c0_0 = arith.constant 0 : index
    %0 = vector.load %arg1[%c0, %c0_0] : memref<128x128xf32, #tpu.memory_space<vmem>>, vector<128x128xf32>
    %c0_1 = arith.constant 0 : index
    %c0_2 = arith.constant 0 : index
    %1 = vector.load %arg2[%c0_1, %c0_2] : memref<128x128xf32, #tpu.memory_space<vmem>>, vector<128x128xf32>
    %cst = arith.constant dense<0.000000e+00> : vector<128x128xf32>
    %2 = tpu.matmul %0, %1, %cst {dimension_numbers = #tpu.dot_dimension_numbers<[1], [0], [0], [1], [0, 0, 1, 1], [], []>} : vector<128x128xf32>, vector<128x128xf32>, vector<128x128xf32> -> vector<128x128xf32>
    %c0_3 = arith.constant 0 : index
    %c0_4 = arith.constant 0 : index
    %3 = vector.load %arg3[%c0_3, %c0_4] : memref<1x128xf32, #tpu.memory_space<vmem>>, vector<1x128xf32>
    %4 = vector.broadcast %3 : vector<1x128xf32> to vector<128x128xf32>
    %5 = arith.addf %2, %4 : vector<128x128xf32>
    %6 = arith.mulf %5, %5 : vector<128x128xf32>
    %7 = arith.mulf %5, %6 : vector<128x128xf32>
    %cst_5 = arith.constant 4.471500e-02 : f32
    %8 = vector.broadcast %cst_5 : f32 to vector<128x128xf32>
    %9 = arith.mulf %8, %7 : vector<128x128xf32>
    %10 = arith.addf %5, %9 : vector<128x128xf32>
    %cst_6 = arith.constant 0.797884583 : f32
    %11 = vector.broadcast %cst_6 : f32 to vector<128x128xf32>
    %12 = arith.mulf %11, %10 : vector<128x128xf32>
    %13 = math.tanh %12 : vector<128x128xf32>
    %cst_7 = arith.constant 1.000000e+00 : f32
    %14 = vector.broadcast %cst_7 : f32 to vector<128x128xf32>
    %15 = arith.addf %14, %13 : vector<128x128xf32>
    %cst_8 = arith.constant 5.000000e-01 : f32
    %16 = vector.broadcast %cst_8 : f32 to vector<128x128xf32>
    %17 = arith.mulf %16, %15 : vector<128x128xf32>
    %18 = arith.mulf %5, %17 : vector<128x128xf32>
    %19 = arith.addf %18, %0 : vector<128x128xf32>
    %c0_9 = arith.constant 0 : index
    %c0_10 = arith.constant 0 : index
    %20 = vector.load %arg4[%c0_9, %c0_10] : memref<128x128xf32, #tpu.memory_space<vmem>>, vector<128x128xf32>
    tpu.vector_store %arg4[%c0_9, %c0_10], %19 {strides = array<i32>} : memref<128x128xf32, #tpu.memory_space<vmem>>, vector<128x128xf32>,
    return
  }
  func.func @transform_0(%arg0: i32) -> (i32, i32) {
    %c0_i32 = arith.constant 0 : i32
    %c0_i32_0 = arith.constant 0 : i32
    return %arg0, %c0_i32 : i32, i32
  }
  func.func @transform_1(%arg0: i32) -> (i32, i32) {
    %c0_i32 = arith.constant 0 : i32
    %c0_i32_0 = arith.constant 0 : i32
    %c0_i32_1 = arith.constant 0 : i32
    return %c0_i32, %c0_i32_0 : i32, i32
  }
  func.func @transform_2(%arg0: i32) -> (i32, i32) {
    %c0_i32 = arith.constant 0 : i32
    %c0_i32_0 = arith.constant 0 : i32
    %c0_i32_1 = arith.constant 0 : i32
    return %c0_i32, %c0_i32_0 : i32, i32
  }
  func.func @transform_3(%arg0: i32) -> (i32, i32) {
    %c0_i32 = arith.constant 0 : i32
    %c0_i32_0 = arith.constant 0 : i32
    return %arg0, %c0_i32 : i32, i32
  }
}

</mosaic_0001>

<llo_original>
// kernel: tpu_custom_call.1
$region0: #{tpu_custom_call.1}
  #allocation0 [shape = 'u32[]', space=smem, size = 0x4, offset = 0x4, fixed_abs, tag = 'smem constant byte address 0x4 - core index']
  #allocation1 [shape = 'u32[72,128]{1,0:T(1,128)}', space=vmem, size = 0x9000, scoped, tag = 'internal scratch']
  %s0 = inlined_call_operand.hbm [shape: f32[512,128], index: 0, kind: input, shape index: {}, may-alias: {0,3}]
  %s1 = inlined_call_operand.vmem [shape: f32[128,128], index: 1, kind: input, shape index: {}]
  %s2 = inlined_call_operand.vmem [shape: f32[1,128], index: 2, kind: input, shape index: {}]
  %s3 = inlined_call_operand.hbm [shape: f32[512,128], index: 3, kind: output, shape index: {}, may-alias: {0,3}]
  %s4 = sld [smem:[#allocation0]]
  $region49: #{tpu_custom_call.1} parent=0
    _
  %s6 = ssub.s32 1, %s4
  %s7 = scalar_select 0, %s6, %s4
  $region1: #{tpu_custom_call.1} parent=0
    #allocation2 [shape = 'u8[131072]{0}', space=vmem, size = 0x20000, scoped, tag = 'input window, operand 0']
    #allocation3 [shape = 's32[2]{0}', space=sflag, size = 0x8, scoped, tag = 'scoped memory for tpu_custom_call.1']
    #allocation4 [shape = 's32[2]{0}', space=sflag, size = 0x8, scoped, tag = 'scoped memory for tpu_custom_call.1']
    #allocation5 [shape = 'u8[131072]{0}', space=vmem, size = 0x20000, scoped, tag = 'output window, operand 0']
    %8 = vsyncpa [#allocation3], 0
    %s9 = scalar_lea.sflag [#allocation3], 1
    %10 = vsyncpa %s9, 0
    %11 = vsyncpa [#allocation4], 0
    %s12 = scalar_lea.sflag [#allocation4], 1
    %13 = vsyncpa %s12, 0
    loop: start=0, step=1, limit=6
    $region2: #{tpu_custom_call.1} parent=1 // loop_pre_header
      _
    $region3: #{tpu_custom_call.1} parent=1 // loop_header
      %s15 = sphi 0, %s19
      %p16 = scmp.ge.s32.totalorder %s15, 6
      %s25 = sphi 0, %s27
      %s28 = sphi 0, %s25
      %s29 = sphi 0, %s28
      %s45 = sphi 0, %s29
      %s49 = sphi 0, %s49
      %s51 = sphi 0, %s49
      %s52 = sphi 0, %s51
      %s66 = sphi 0, %s52
      %s70 = sphi 0, %s70
      %s72 = sphi 0, %s70
      %s73 = sphi 0, %s72
      %s87 = sphi 0, %s73
      %s93 = sphi 0, %s95
      %s96 = sphi 0, %s93
      %s97 = sphi 0, %s96
      %s113 = sphi 0, %s97
    $region4: #{tpu_custom_call.1} parent=1 // loop_header_branch
      %18 = sbr.rel (%p16) target = $region8
    $region5: #{tpu_custom_call.1} parent=1 // loop_body
      %s20 = ssub.s32 %s15, 1
      %s21 = ssub.s32 %s15, 2
      %s22 = sadd.s32 %s15, 1
      %s23 = ssub.s32 %s15, %s22
      %p24 = scmp.eq.s32.totalorder %s23, 0
      %s26 = sadd.s32 %s25, 1
      %s27 = scalar_select %p24, %s25, %s26
      %p30 = pneg %p24
      %p31 = scmp.eq.s32.totalorder %s15, 3
      %p32 = por %p30, %p31
      %p33 = scmp.ne.s32.totalorder %s25, %s28
      %p34 = scmp.eq.s32.totalorder %s15, 0
      %p35 = por %p33, %p34
      %p36 = scmp.ne.s32.totalorder %s25, %s28
      %p37 = scmp.eq.s32.totalorder %s20, 3
      %p38 = por %p36, %p37
      %p39 = scmp.ne.s32.totalorder %s28, %s29
      %p40 = scmp.eq.s32.totalorder %s20, 0
      %p41 = por %p39, %p40
      %p42 = scmp.ne.s32.totalorder %s28, %s29
      %p43 = scmp.eq.s32.totalorder %s21, 3
      %p44 = por %p42, %p43
      %p46 = scmp.ne.s32.totalorder %s29, %s45
      %p47 = scmp.eq.s32.totalorder %s21, 0
      %p48 = por %p46, %p47
      %s50 = sadd.s32 %s49, 1
      %p53 = scmp.eq.s32.totalorder %s15, 3
      %p54 = scmp.ne.s32.totalorder %s49, %s51
      %p55 = scmp.eq.s32.totalorder %s15, 0
      %p56 = por %p54, %p55
      %p57 = scmp.ne.s32.totalorder %s49, %s51
      %p58 = scmp.eq.s32.totalorder %s20, 3
      %p59 = por %p57, %p58
      %p60 = scmp.ne.s32.totalorder %s51, %s52
      %p61 = scmp.eq.s32.totalorder %s20, 0
      %p62 = por %p60, %p61
      %p63 = scmp.ne.s32.totalorder %s51, %s52
      %p64 = scmp.eq.s32.totalorder %s21, 3
      %p65 = por %p63, %p64
      %p67 = scmp.ne.s32.totalorder %s52, %s66
      %p68 = scmp.eq.s32.totalorder %s21, 0
      %p69 = por %p67, %p68
      %s71 = sadd.s32 %s70, 1
      %p74 = scmp.eq.s32.totalorder %s15, 3
      %p75 = scmp.ne.s32.totalorder %s70, %s72
      %p76 = scmp.eq.s32.totalorder %s15, 0
      %p77 = por %p75, %p76
      %p78 = scmp.ne.s32.totalorder %s70, %s72
      %p79 = scmp.eq.s32.totalorder %s20, 3
      %p80 = por %p78, %p79
      %p81 = scmp.ne.s32.totalorder %s72, %s73
      %p82 = scmp.eq.s32.totalorder %s20, 0
      %p83 = por %p81, %p82
      %p84 = scmp.ne.s32.totalorder %s72, %s73
      %p85 = scmp.eq.s32.totalorder %s21, 3
      %p86 = por %p84, %p85
      %p88 = scmp.ne.s32.totalorder %s73, %s87
      %p89 = scmp.eq.s32.totalorder %s21, 0
      %p90 = por %p88, %p89
      %s91 = ssub.s32 %s15, %s22
      %p92 = scmp.eq.s32.totalorder %s91, 0
      %s94 = sadd.s32 %s93, 1
      %s95 = scalar_select %p92, %s93, %s94
      %p98 = pneg %p92
      %p99 = scmp.eq.s32.totalorder %s15, 3
      %p100 = por %p98, %p99
      %p101 = scmp.ne.s32.totalorder %s93, %s96
      %p102 = scmp.eq.s32.totalorder %s15, 0
      %p103 = por %p101, %p102
      %p104 = scmp.ne.s32.totalorder %s93, %s96
      %p105 = scmp.eq.s32.totalorder %s20, 3
      %p106 = por %p104, %p105
      %p107 = scmp.ne.s32.totalorder %s96, %s97
      %p108 = scmp.eq.s32.totalorder %s20, 0
      %p109 = por %p107, %p108
      %p110 = scmp.ne.s32.totalorder %s96, %s97
      %p111 = scmp.eq.s32.totalorder %s21, 3
      %p112 = por %p110, %p111
      %p114 = scmp.ne.s32.totalorder %s97, %s113
      %p115 = scmp.eq.s32.totalorder %s21, 0
      %p116 = por %p114, %p115
      %p117 = scmp.le.s32.totalorder 1, %s15
      %p118 = scmp.lt.s32.totalorder %s15, 5
      %p119 = pnand %p117, %p118
      %p120 = pneg %p119
      // Predicated region
      $region9: #{tpu_custom_call.1} parent=5 // pred_check
        _
      $region10: #{tpu_custom_call.1} parent=5 // pred_check_branch
        %122 = sbr.rel (%p119) target = $region12
      $region11: #{tpu_custom_call.1} parent=5 // pred_region
        %s123 = ssub.s32 %s15, 1
        // Predicated region
        $region13: #{tpu_custom_call.1} parent=11 // pred_check
          %p124 = pneg %p62
        $region14: #{tpu_custom_call.1} parent=11 // pred_check_branch
          %126 = sbr.rel (%p124) target = $region16
        $region15: #{tpu_custom_call.1} parent=11 // pred_region
          _
        $region16: #{tpu_custom_call.1} parent=11 // pred_fallthru
          _
        // Predicated region
        $region17: #{tpu_custom_call.1} parent=11 // pred_check
          %p127 = pneg %p83
        $region18: #{tpu_custom_call.1} parent=11 // pred_check_branch
          %129 = sbr.rel (%p127) target = $region20
        $region19: #{tpu_custom_call.1} parent=11 // pred_region
          _
        $region20: #{tpu_custom_call.1} parent=11 // pred_fallthru
          _
      $region12: #{tpu_custom_call.1} parent=5 // pred_fallthru
        _
      %p130 = scmp.lt.s32.totalorder %s15, 4
      // Predicated region
      $region21: #{tpu_custom_call.1} parent=5 // pred_check
        %p131 = pneg %p130
      $region22: #{tpu_custom_call.1} parent=5 // pred_check_branch
        %133 = sbr.rel (%p131) target = $region24
      $region23: #{tpu_custom_call.1} parent=5 // pred_region
        // Predicated region
        $region25: #{tpu_custom_call.1} parent=23 // pred_check
          %p134 = pneg %p35
        $region26: #{tpu_custom_call.1} parent=23 // pred_check_branch
          %136 = sbr.rel (%p134) target = $region28
        $region27: #{tpu_custom_call.1} parent=23 // pred_region
          %s137 = sand.u32 %s25, 1
          %s138 = scalar_lea.sflag [#allocation3], %s137
          %s139 = sand.u32 %s25, 1
          %s140 = smul.addr %s139, 128
          %s141 = scalar_lea.vmem [#allocation2], %s140
          %s142 = smul.u32 16, %s15
          %144 = vsyncadd %s138, 0
          %s145 = smul.addr %s142, 8
          %s146 = scalar_lea.hbm %s0, %s145
          %s147 = sshll.u32 %s146, 4
          %s148 = int_to_ptr.hbm [resolvable:$true] %s147
          %s149 = sshll.u32 %s141, 4
          %s150 = int_to_ptr.vmem [resolvable:$true] %s149
          %155 = dma.hbm_to_vmem [thread:$0]  %s148, 2048, %s150, %s138, 128, 128, 8
        $region28: #{tpu_custom_call.1} parent=23 // pred_fallthru
          _
      $region24: #{tpu_custom_call.1} parent=5 // pred_fallthru
        _
      %p156 = scmp.le.s32.totalorder 1, %s15
      %p157 = scmp.lt.s32.totalorder %s15, 5
      %p158 = pnand %p156, %p157
      %p159 = pneg %p158
      // Predicated region
      $region29: #{tpu_custom_call.1} parent=5 // pred_check
        _
      $region30: #{tpu_custom_call.1} parent=5 // pred_check_branch
        %161 = sbr.rel (%p158) target = $region32
      $region31: #{tpu_custom_call.1} parent=5 // pred_region
        %s162 = ssub.s32 %s15, 1
        %s163 = sand.u32 %s28, 1
        %s164 = scalar_lea.sflag [#allocation3], %s163
        %s165 = sand.u32 %s28, 1
        %s166 = smul.addr %s165, 128
        %s167 = scalar_lea.vmem [#allocation2], %s166
        // Predicated region
        $region33: #{tpu_custom_call.1} parent=31 // pred_check
          %p168 = pneg %p41
        $region34: #{tpu_custom_call.1} parent=31 // pred_check_branch
          %170 = sbr.rel (%p168) target = $region36
        $region35: #{tpu_custom_call.1} parent=31 // pred_region
          %172 = dma.done %s164, 2048
        $region36: #{tpu_custom_call.1} parent=31 // pred_fallthru
          _
        %s173 = sand.u32 %s28, 1
        %s174 = scalar_lea.sflag [#allocation3], %s173
        %s175 = sand.u32 %s28, 1
        %s176 = smul.addr %s175, 128
        %s177 = scalar_lea.vmem [#allocation2], %s176
        %p178 = pneg %p41
        %p179 = pneg %p38
        %p180 = pneg %p62
        %p181 = pneg %p59
        %p182 = pneg %p83
        %p183 = pneg %p80
        %p184 = pneg %p109
        %p185 = pneg %p106
        %s186 = sand.u32 %s96, 1
        %s187 = scalar_lea.sflag [#allocation4], %s186
        %s188 = sand.u32 %s96, 1
        %s189 = smul.addr %s188, 128
        %s190 = scalar_lea.vmem [#allocation5], %s189
        %s191 = smul.u32 16, %s20
        %s192 = smul.u32 16, %s20
        %v193 = vld [vmem:[%s167] sm:$0xff]
        %v194 = vld [vmem:[%s167 + $0x8] sm:$0xff]
        %v195 = vld [vmem:[%s167 + $0x10] sm:$0xff]
        %v196 = vld [vmem:[%s167 + $0x18] sm:$0xff]
        %v197 = vld [vmem:[%s167 + $0x20] sm:$0xff]
        %v198 = vld [vmem:[%s167 + $0x28] sm:$0xff]
        %v199 = vld [vmem:[%s167 + $0x30] sm:$0xff]
        %v200 = vld [vmem:[%s167 + $0x38] sm:$0xff]
        %v201 = vld [vmem:[%s167 + $0x40] sm:$0xff]
        %v202 = vld [vmem:[%s167 + $0x48] sm:$0xff]
        %v203 = vld [vmem:[%s167 + $0x50] sm:$0xff]
        %v204 = vld [vmem:[%s167 + $0x58] sm:$0xff]
        %v205 = vld [vmem:[%s167 + $0x60] sm:$0xff]
        %v206 = vld [vmem:[%s167 + $0x68] sm:$0xff]
        %v207 = vld [vmem:[%s167 + $0x70] sm:$0xff]
        %v208 = vld [vmem:[%s167 + $0x78] sm:$0xff]
        %v209 = vld [vmem:[%s1] sm:$0xff]
        %v210 = vld [vmem:[%s1 + $0x8] sm:$0xff]
        %v211 = vld [vmem:[%s1 + $0x10] sm:$0xff]
        %v212 = vld [vmem:[%s1 + $0x18] sm:$0xff]
        %v213 = vld [vmem:[%s1 + $0x20] sm:$0xff]
        %v214 = vld [vmem:[%s1 + $0x28] sm:$0xff]
        %v215 = vld [vmem:[%s1 + $0x30] sm:$0xff]
        %v216 = vld [vmem:[%s1 + $0x38] sm:$0xff]
        %v217 = vld [vmem:[%s1 + $0x40] sm:$0xff]
        %v218 = vld [vmem:[%s1 + $0x48] sm:$0xff]
        %v219 = vld [vmem:[%s1 + $0x50] sm:$0xff]
        %v220 = vld [vmem:[%s1 + $0x58] sm:$0xff]
        %v221 = vld [vmem:[%s1 + $0x60] sm:$0xff]
        %v222 = vld [vmem:[%s1 + $0x68] sm:$0xff]
        %v223 = vld [vmem:[%s1 + $0x70] sm:$0xff]
        %v224 = vld [vmem:[%s1 + $0x78] sm:$0xff]
        %v225 = vld [vmem:[%s2] sm:$0x1]
        %v227 = vperm.slane %v225, 0
        %229 = vmatpush.msra.mxu0 %v224
        %230 = vmatpush.msra.mxu0 %v223
        %231 = vmatpush.msra.mxu0 %v222
        %232 = vmatpush.msra.mxu0 %v221
        %233 = vmatpush.msra.mxu0 %v220
        %234 = vmatpush.msra.mxu0 %v219
        %235 = vmatpush.msra.mxu0 %v218
        %236 = vmatpush.msra.mxu0 %v217
        %237 = vmatpush.msra.mxu0 %v216
        %238 = vmatpush.msra.mxu0 %v215
        %239 = vmatpush.msra.mxu0 %v214
        %240 = vmatpush.msra.mxu0 %v213
        %241 = vmatpush.msra.mxu0 %v212
        %242 = vmatpush.msra.mxu0 %v211
        %243 = vmatpush.msra.mxu0 %v210
        %244 = vmatpush.msra.mxu0 %v209
        %245 = vmatmul.f32.gmra.mxu0 %v193
        %v246 = vpop.f32.mrf.mxu0
        %v247 = vadd.f32 %v227, %v246
        %248 = vmatmul.f32.gmra.mxu0 %v194
        %v249 = vpop.f32.mrf.mxu0
        %v250 = vadd.f32 %v227, %v249
        %251 = vmatmul.f32.gmra.mxu0 %v195
        %v252 = vpop.f32.mrf.mxu0
        %v253 = vadd.f32 %v227, %v252
        %254 = vmatmul.f32.gmra.mxu0 %v196
        %v255 = vpop.f32.mrf.mxu0
        %v256 = vadd.f32 %v227, %v255
        %257 = vmatmul.f32.gmra.mxu0 %v197
        %v258 = vpop.f32.mrf.mxu0
        %v259 = vadd.f32 %v227, %v258
        %260 = vmatmul.f32.gmra.mxu0 %v198
        %v261 = vpop.f32.mrf.mxu0
        %v262 = vadd.f32 %v227, %v261
        %263 = vmatmul.f32.gmra.mxu0 %v199
        %v264 = vpop.f32.mrf.mxu0
        %v265 = vadd.f32 %v227, %v264
        %266 = vmatmul.f32.gmra.mxu0 %v200
        %v267 = vpop.f32.mrf.mxu0
        %v268 = vadd.f32 %v227, %v267
        %269 = vmatmul.f32.gmra.mxu0 %v201
        %v270 = vpop.f32.mrf.mxu0
        %v271 = vadd.f32 %v227, %v270
        %272 = vmatmul.f32.gmra.mxu0 %v202
        %v273 = vpop.f32.mrf.mxu0
        %v274 = vadd.f32 %v227, %v273
        %275 = vmatmul.f32.gmra.mxu0 %v203
        %v276 = vpop.f32.mrf.mxu0
        %v277 = vadd.f32 %v227, %v276
        %278 = vmatmul.f32.gmra.mxu0 %v204
        %v279 = vpop.f32.mrf.mxu0
        %v280 = vadd.f32 %v227, %v279
        %281 = vmatmul.f32.gmra.mxu0 %v205
        %v282 = vpop.f32.mrf.mxu0
        %v283 = vadd.f32 %v227, %v282
        %284 = vmatmul.f32.gmra.mxu0 %v206
        %v285 = vpop.f32.mrf.mxu0
        %v286 = vadd.f32 %v227, %v285
        %287 = vmatmul.f32.gmra.mxu0 %v207
        %v288 = vpop.f32.mrf.mxu0
        %v289 = vadd.f32 %v227, %v288
        %290 = vmatmul.f32.gmra.mxu0 %v208
        %v291 = vpop.f32.mrf.mxu0
        %v292 = vadd.f32 %v227, %v291
        %293 = vdwg.mxu0
        %v294 = vmul.f32 %v247, %v247
        %v295 = vmul.f32 %v250, %v250
        %v296 = vmul.f32 %v253, %v253
        %v297 = vmul.f32 %v256, %v256
        %v298 = vmul.f32 %v259, %v259
        %v299 = vmul.f32 %v262, %v262
        %v300 = vmul.f32 %v265, %v265
        %v301 = vmul.f32 %v268, %v268
        %v302 = vmul.f32 %v271, %v271
        %v303 = vmul.f32 %v274, %v274
        %v304 = vmul.f32 %v277, %v277
        %v305 = vmul.f32 %v280, %v280
        %v306 = vmul.f32 %v283, %v283
        %v307 = vmul.f32 %v286, %v286
        %v308 = vmul.f32 %v289, %v289
        %v309 = vmul.f32 %v292, %v292
        %v310 = vmul.f32 %v247, %v294
        %v311 = vmul.f32 %v250, %v295
        %v312 = vmul.f32 %v253, %v296
        %v313 = vmul.f32 %v256, %v297
        %v314 = vmul.f32 %v259, %v298
        %v315 = vmul.f32 %v262, %v299
        %v316 = vmul.f32 %v265, %v300
        %v317 = vmul.f32 %v268, %v301
        %v318 = vmul.f32 %v271, %v302
        %v319 = vmul.f32 %v274, %v303
        %v320 = vmul.f32 %v277, %v304
        %v321 = vmul.f32 %v280, %v305
        %v322 = vmul.f32 %v283, %v306
        %v323 = vmul.f32 %v286, %v307
        %v324 = vmul.f32 %v289, %v308
        %v325 = vmul.f32 %v292, %v309
        %v326 = vmul.f32 %v310, 0.044715
        %v327 = vmul.f32 %v311, 0.044715
        %v328 = vmul.f32 %v312, 0.044715
        %v329 = vmul.f32 %v313, 0.044715
        %v330 = vmul.f32 %v314, 0.044715
        %v331 = vmul.f32 %v315, 0.044715
        %v332 = vmul.f32 %v316, 0.044715
        %v333 = vmul.f32 %v317, 0.044715
        %v334 = vmul.f32 %v318, 0.044715
        %v335 = vmul.f32 %v319, 0.044715
        %v336 = vmul.f32 %v320, 0.044715
        %v337 = vmul.f32 %v321, 0.044715
        %v338 = vmul.f32 %v322, 0.044715
        %v339 = vmul.f32 %v323, 0.044715
        %v340 = vmul.f32 %v324, 0.044715
        %v341 = vmul.f32 %v325, 0.044715
        %v342 = vadd.f32 %v247, %v326
        %v343 = vadd.f32 %v250, %v327
        %v344 = vadd.f32 %v253, %v328
        %v345 = vadd.f32 %v256, %v329
        %v346 = vadd.f32 %v259, %v330
        %v347 = vadd.f32 %v262, %v331
        %v348 = vadd.f32 %v265, %v332
        %v349 = vadd.f32 %v268, %v333
        %v350 = vadd.f32 %v271, %v334
        %v351 = vadd.f32 %v274, %v335
        %v352 = vadd.f32 %v277, %v336
        %v353 = vadd.f32 %v280, %v337
        %v354 = vadd.f32 %v283, %v338
        %v355 = vadd.f32 %v286, %v339
        %v356 = vadd.f32 %v289, %v340
        %v357 = vadd.f32 %v292, %v341
        %v358 = vmul.f32 %v342, 0.7978846
        %v359 = vmul.f32 %v343, 0.7978846
        %v360 = vmul.f32 %v344, 0.7978846
        %v361 = vmul.f32 %v345, 0.7978846
        %v362 = vmul.f32 %v346, 0.7978846
        %v363 = vmul.f32 %v347, 0.7978846
        %v364 = vmul.f32 %v348, 0.7978846
        %v365 = vmul.f32 %v349, 0.7978846
        %v366 = vmul.f32 %v350, 0.7978846
        %v367 = vmul.f32 %v351, 0.7978846
        %v368 = vmul.f32 %v352, 0.7978846
        %v369 = vmul.f32 %v353, 0.7978846
        %v370 = vmul.f32 %v354, 0.7978846
        %v371 = vmul.f32 %v355, 0.7978846
        %v372 = vmul.f32 %v356, 0.7978846
        %v373 = vmul.f32 %v357, 0.7978846
        %v374 = vtanh.pop %v358
        %v375 = vtanh.pop %v359
        %v376 = vtanh.pop %v360
        %v377 = vtanh.pop %v361
        %v378 = vtanh.pop %v362
        %v379 = vtanh.pop %v363
        %v380 = vtanh.pop %v364
        %v381 = vtanh.pop %v365
        %v382 = vtanh.pop %v366
        %v383 = vtanh.pop %v367
        %v384 = vtanh.pop %v368
        %v385 = vtanh.pop %v369
        %v386 = vtanh.pop %v370
        %v387 = vtanh.pop %v371
        %v388 = vtanh.pop %v372
        %v389 = vtanh.pop %v373
        %v390 = vadd.f32 %v374, 1.0
        %v391 = vadd.f32 %v375, 1.0
        %v392 = vadd.f32 %v376, 1.0
        %v393 = vadd.f32 %v377, 1.0
        %v394 = vadd.f32 %v378, 1.0
        %v395 = vadd.f32 %v379, 1.0
        %v396 = vadd.f32 %v380, 1.0
        %v397 = vadd.f32 %v381, 1.0
        %v398 = vadd.f32 %v382, 1.0
        %v399 = vadd.f32 %v383, 1.0
        %v400 = vadd.f32 %v384, 1.0
        %v401 = vadd.f32 %v385, 1.0
        %v402 = vadd.f32 %v386, 1.0
        %v403 = vadd.f32 %v387, 1.0
        %v404 = vadd.f32 %v388, 1.0
        %v405 = vadd.f32 %v389, 1.0
        %v406 = vmul.f32 %v390, 0.5
        %v407 = vmul.f32 %v391, 0.5
        %v408 = vmul.f32 %v392, 0.5
        %v409 = vmul.f32 %v393, 0.5
        %v410 = vmul.f32 %v394, 0.5
        %v411 = vmul.f32 %v395, 0.5
        %v412 = vmul.f32 %v396, 0.5
        %v413 = vmul.f32 %v397, 0.5
        %v414 = vmul.f32 %v398, 0.5
        %v415 = vmul.f32 %v399, 0.5
        %v416 = vmul.f32 %v400, 0.5
        %v417 = vmul.f32 %v401, 0.5
        %v418 = vmul.f32 %v402, 0.5
        %v419 = vmul.f32 %v403, 0.5
        %v420 = vmul.f32 %v404, 0.5
        %v421 = vmul.f32 %v405, 0.5
        %v422 = vmul.f32 %v247, %v406
        %v423 = vmul.f32 %v250, %v407
        %v424 = vmul.f32 %v253, %v408
        %v425 = vmul.f32 %v256, %v409
        %v426 = vmul.f32 %v259, %v410
        %v427 = vmul.f32 %v262, %v411
        %v428 = vmul.f32 %v265, %v412
        %v429 = vmul.f32 %v268, %v413
        %v430 = vmul.f32 %v271, %v414
        %v431 = vmul.f32 %v274, %v415
        %v432 = vmul.f32 %v277, %v416
        %v433 = vmul.f32 %v280, %v417
        %v434 = vmul.f32 %v283, %v418
        %v435 = vmul.f32 %v286, %v419
        %v436 = vmul.f32 %v289, %v420
        %v437 = vmul.f32 %v292, %v421
        %v438 = vadd.f32 %v422, %v193
        %v439 = vadd.f32 %v423, %v194
        %v440 = vadd.f32 %v424, %v195
        %v441 = vadd.f32 %v425, %v196
        %v442 = vadd.f32 %v426, %v197
        %v443 = vadd.f32 %v427, %v198
        %v444 = vadd.f32 %v428, %v199
        %v445 = vadd.f32 %v429, %v200
        %v446 = vadd.f32 %v430, %v201
        %v447 = vadd.f32 %v431, %v202
        %v448 = vadd.f32 %v432, %v203
        %v449 = vadd.f32 %v433, %v204
        %v450 = vadd.f32 %v434, %v205
        %v451 = vadd.f32 %v435, %v206
        %v452 = vadd.f32 %v436, %v207
        %v453 = vadd.f32 %v437, %v208
        %454 = vst [vmem:[%s190] sm:$0xff] %v438
        %455 = vst [vmem:[%s190 + $0x8] sm:$0xff] %v439
        %456 = vst [vmem:[%s190 + $0x10] sm:$0xff] %v440
        %457 = vst [vmem:[%s190 + $0x18] sm:$0xff] %v441
        %458 = vst [vmem:[%s190 + $0x20] sm:$0xff] %v442
        %459 = vst [vmem:[%s190 + $0x28] sm:$0xff] %v443
        %460 = vst [vmem:[%s190 + $0x30] sm:$0xff] %v444
        %461 = vst [vmem:[%s190 + $0x38] sm:$0xff] %v445
        %462 = vst [vmem:[%s190 + $0x40] sm:$0xff] %v446
        %463 = vst [vmem:[%s190 + $0x48] sm:$0xff] %v447
        %464 = vst [vmem:[%s190 + $0x50] sm:$0xff] %v448
        %465 = vst [vmem:[%s190 + $0x58] sm:$0xff] %v449
        %466 = vst [vmem:[%s190 + $0x60] sm:$0xff] %v450
        %467 = vst [vmem:[%s190 + $0x68] sm:$0xff] %v451
        %468 = vst [vmem:[%s190 + $0x70] sm:$0xff] %v452
        %469 = vst [vmem:[%s190 + $0x78] sm:$0xff] %v453
        %s470 = sand.u32 %s96, 1
        %s471 = scalar_lea.sflag [#allocation4], %s470
        %s472 = sand.u32 %s96, 1
        %s473 = smul.addr %s472, 128
        %s474 = scalar_lea.vmem [#allocation5], %s473
        // Predicated region
        $region37: #{tpu_custom_call.1} parent=31 // pred_check
          %p475 = pneg %p106
        $region38: #{tpu_custom_call.1} parent=31 // pred_check_branch
          %477 = sbr.rel (%p475) target = $region40
        $region39: #{tpu_custom_call.1} parent=31 // pred_region
          %s478 = smul.u32 16, %s20
          %480 = vsyncadd %s471, 0
          %s481 = smul.addr %s478, 8
          %s482 = scalar_lea.hbm %s3, %s481
          %s483 = sshll.u32 %s474, 4
          %s484 = int_to_ptr.vmem [resolvable:$true] %s483
          %s485 = sshll.u32 %s482, 4
          %s486 = int_to_ptr.hbm [resolvable:$true] %s485
          %491 = dma.vmem_to_hbm [thread:$0]  %s484, 2048, %s486, %s471, 128, 128, 8
        $region40: #{tpu_custom_call.1} parent=31 // pred_fallthru
          _
      $region32: #{tpu_custom_call.1} parent=5 // pred_fallthru
        _
      %p492 = scmp.le.s32.totalorder 2, %s15
      // Predicated region
      $region41: #{tpu_custom_call.1} parent=5 // pred_check
        %p493 = pneg %p492
      $region42: #{tpu_custom_call.1} parent=5 // pred_check_branch
        %495 = sbr.rel (%p493) target = $region44
      $region43: #{tpu_custom_call.1} parent=5 // pred_region
        %s496 = ssub.s32 %s15, 2
        // Predicated region
        $region45: #{tpu_custom_call.1} parent=43 // pred_check
          %p497 = pneg %p112
        $region46: #{tpu_custom_call.1} parent=43 // pred_check_branch
          %499 = sbr.rel (%p497) target = $region48
        $region47: #{tpu_custom_call.1} parent=43 // pred_region
          %s500 = sand.u32 %s97, 1
          %s501 = scalar_lea.sflag [#allocation4], %s500
          %s502 = sand.u32 %s97, 1
          %s503 = smul.addr %s502, 128
          %s504 = scalar_lea.vmem [#allocation5], %s503
          %506 = dma.done %s501, 2048
        $region48: #{tpu_custom_call.1} parent=43 // pred_fallthru
          _
      $region44: #{tpu_custom_call.1} parent=5 // pred_fallthru
        _
    $region6: #{tpu_custom_call.1} parent=1 // loop_footer
      %s19 = sadd.s32 1, %s15
    $region7: #{tpu_custom_call.1} parent=1 // loop_footer_branch
      %14 = sbr.rel target = $region3
    $region8: #{tpu_custom_call.1} parent=1 // loop_exit
      _
    %507 = vsyncpa [#allocation3], 1
    %s508 = scalar_lea.sflag [#allocation3], 1
    %509 = vsyncpa %s508, 1
    %510 = vsyncpa [#allocation4], 1
    %s511 = scalar_lea.sflag [#allocation4], 1
    %512 = vsyncpa %s511, 1

</llo_original>
